<compile_context>
chip_gen: v7x
topology: tpu7x:2x2x1
jax: 0.10.0
libtpu: 0.0.40
codegen_flags: <defaults>
</compile_context>

<pallas_src>
import functools

import jax
import jax.numpy as jnp
from jax.experimental import pallas as pl
from jax.experimental.pallas import tpu as pltpu

_LANE = 128
_SUBLANE = 8
# 4096 x 128 f32 = 2 MiB per input block; 3 inputs x 2 pipeline buffers
# ~= 12 MiB live VMEM.
_MAX_TILE_ROWS = 4096
_VMEM_LIMIT_BYTES = 32 * 1024 * 1024


def _mask_l1_kernel(p_ref, g_ref, m_ref, num_ref, den_ref, *,
                    rows_total, tile_rows, ragged):
    i = pl.program_id(0)   # row-tile axis ("parallel": megacore-sharded on v7x)
    b = pl.program_id(1)   # broadcast (leading) axis, innermost -> mask block
                           # is reused across it without re-DMA

    p = p_ref[...].astype(jnp.float32)
    g = g_ref[...].astype(jnp.float32)
    m = m_ref[...].astype(jnp.float32)

    def accumulate(prod, msk):
        # Sublane-group add down to one (8, 128) vreg: splitting the sublane
        # axis at a multiple of 8 is layout-free, so this is pure VALU adds
        # (no XLU sublane reduce per step).
        psum = jnp.sum(prod.reshape(tile_rows // _SUBLANE, _SUBLANE, _LANE),
                       axis=0)

        @pl.when(b == 0)
        def _():
            num_ref[...] = psum
            # Count each mask element exactly once (un-broadcast sum).
            den_ref[...] = jnp.sum(
                msk.reshape(tile_rows // _SUBLANE, _SUBLANE, _LANE), axis=0)

        @pl.when(b != 0)
        def _():
            num_ref[...] += psum

    if ragged:
        # Only the LAST row tile extends past the end of the arrays; gate the
        # iota/where masking to it so every other step takes the cheap path.
        is_last = i == pl.num_programs(0) - 1

        @pl.when(is_last)
        def _():
            row_ids = jax.lax.broadcasted_iota(jnp.int32, (tile_rows, _LANE), 0)
            valid = row_ids < (rows_total - i * tile_rows)
            prod = jnp.where(valid, jnp.abs(p - g) * m, 0.0)
            accumulate(prod, jnp.where(valid, m, 0.0))

        @pl.when(jnp.logical_not(is_last))
        def _():
            accumulate(jnp.abs(p - g) * m, m)
    else:
        accumulate(jnp.abs(p - g) * m, m)


@functools.partial(jax.jit, static_argnames=("eps",))
def mask_l1_loss(pred, gt, mask, eps=1e-6):
    # Exact torch broadcasting semantics for the elementwise product.
    out_shape = jnp.broadcast_shapes(pred.shape, gt.shape, mask.shape)
    nd = len(out_shape)
    m_nd = mask.ndim

    # Split into a leading part (pure broadcast of the mask across it) and the
    # trailing part covered by the mask's own dims (trailing-dim alignment).
    lead_shape = out_shape[: nd - m_nd]
    tail_shape = out_shape[nd - m_nd:]
    B = 1
    for d in lead_shape:
        B *= d
    M = 1
    for d in tail_shape:
        M *= d

    # No-op when pred/gt already have the full broadcast shape (the common
    # (N,C,H,W) case); otherwise XLA materializes the broadcast (perf hazard
    # only, result is still correct).
    pred_b = jnp.broadcast_to(pred, out_shape).reshape(B, M)
    gt_b = jnp.broadcast_to(gt, out_shape).reshape(B, M)
    # Only intra-tail size-1 broadcasts of the mask are materialized (rare);
    # the leading broadcast across B is handled purely by the index_map.
    mask_tail = jnp.broadcast_to(mask, tail_shape).reshape(M)
    rep = 1
    for md, td in zip(mask.shape, tail_shape):
        if md != td:
            rep *= td  # replication factor to recover sum of the ORIGINAL mask

    # Lane alignment WITHOUT a jnp.pad full copy: the 128-aligned prefix goes
    # through the kernel; the (< 128 per row) remainder is a tiny JAX epilogue.
    M_aligned = (M // _LANE) * _LANE
    R = M_aligned // _LANE

    if R < _SUBLANE:
        # Too small to fill even one (8, 128) vreg tile (< 1024 elements):
        # pure-JAX fallback, negligible work.
        p32 = pred_b.astype(jnp.float32)
        g32 = gt_b.astype(jnp.float32)
        m32 = mask_tail.astype(jnp.float32)
        numerator = jnp.sum(jnp.abs(p32 - g32) * m32[None, :])
        denominator = jnp.sum(m32) / jnp.float32(rep)
        return numerator / (denominator + jnp.float32(eps))

    tail_num = jnp.float32(0.0)
    tail_den = jnp.float32(0.0)
    if M_aligned < M:
        tail_p = pred_b[:, M_aligned:].astype(jnp.float32)
        tail_g = gt_b[:, M_aligned:].astype(jnp.float32)
        tail_m = mask_tail[M_aligned:].astype(jnp.float32)
        tail_num = jnp.sum(jnp.abs(tail_p - tail_g) * tail_m[None, :])
        tail_den = jnp.sum(tail_m)

    pred3 = pred_b[:, :M_aligned].reshape(B, R, _LANE)
    gt3 = gt_b[:, :M_aligned].reshape(B, R, _LANE)
    mask2 = mask_tail[:M_aligned].reshape(R, _LANE)

    # Row tile: multiple of 8 (sublane alignment), never larger than R,
    # capped by _MAX_TILE_ROWS.
    tile_rows = min(_MAX_TILE_ROWS, (R // _SUBLANE) * _SUBLANE)
    num_tiles = pl.cdiv(R, tile_rows)
    ragged = (R % tile_rows) != 0

    kernel = functools.partial(_mask_l1_kernel, rows_total=R,
                               tile_rows=tile_rows, ragged=ragged)

    # TODO(synk): v7x-only micro-opts not applied: single-buffering the mask
    #             BlockSpec (pl.Buffered(1)) to free VMEM at larger tiles, and
    #             offloading the per-tile add-tree to the MXU via a ones-row
    #             matmul.
    num_acc, den_acc = pl.pallas_call(
        kernel,
        out_shape=(
            jax.ShapeDtypeStruct((num_tiles, _SUBLANE, _LANE), jnp.float32),
            jax.ShapeDtypeStruct((num_tiles, _SUBLANE, _LANE), jnp.float32),
        ),
        grid=(num_tiles, B),
        in_specs=[
            pl.BlockSpec((None, tile_rows, _LANE), lambda i, b: (b, i, 0)),
            pl.BlockSpec((None, tile_rows, _LANE), lambda i, b: (b, i, 0)),
            pl.BlockSpec((tile_rows, _LANE), lambda i, b: (i, 0)),
        ],
        out_specs=(
            pl.BlockSpec((None, _SUBLANE, _LANE), lambda i, b: (i, 0, 0)),
            pl.BlockSpec((None, _SUBLANE, _LANE), lambda i, b: (i, 0, 0)),
        ),
        compiler_params=pltpu.CompilerParams(
            dimension_semantics=("parallel", "arbitrary"),
            vmem_limit_bytes=_VMEM_LIMIT_BYTES),
    )(pred3, gt3, mask2)

    numerator = jnp.sum(num_acc) + tail_num
    denominator = (jnp.sum(den_acc) + tail_den) / jnp.float32(rep)
    return numerator / (denominator + jnp.float32(eps))


if __name__ == "__main__":
    key = jax.random.PRNGKey(0)
    k1, k2, k3 = jax.random.split(key, 3)

    # Note: with mask of rank 3 (N, H, W) and pred of rank 4 (N, C, H, W),
    # torch's trailing-dim broadcasting aligns mask's first dim with C, so it
    # requires C == N (or 1); use N == C = 4.
    N, C, H, W = 4, 4, 16, 16
    pred = jax.random.normal(k1, (N, C, H, W), dtype=jnp.float32)
    gt = jax.random.normal(k2, (N, C, H, W), dtype=jnp.float32)
    mask = (jax.random.uniform(k3, (N, H, W)) > 0.5).astype(jnp.float32)

    loss = mask_l1_loss(pred, gt, mask, eps=1e-6)
    loss = jax.block_until_ready(loss)

    # Pure-JAX reference (same broadcasting semantics as torch).
    ref = (jnp.abs(pred - gt) * mask).sum() / (mask.sum() + 1e-6)
    assert jnp.allclose(loss, ref, rtol=1e-5, atol=1e-5), (loss, ref)

    print("KERNEL_OK")
</pallas_src>

<mosaic_0001>
module attributes {stable_mosaic.version = 11 : i64} {
  func.func @_mask_l1_kernel(%arg0: i32, %arg1: i32, %arg2: memref<1x8x128xf32, #tpu.memory_space<vmem>>, %arg3: memref<1x8x128xf32, #tpu.memory_space<vmem>>, %arg4: memref<8x128xf32, #tpu.memory_space<vmem>>, %arg5: memref<1x8x128xf32, #tpu.memory_space<vmem>>, %arg6: memref<1x8x128xf32, #tpu.memory_space<vmem>>) attributes {dimension_semantics = [#tpu.dimension_semantics<parallel>, #tpu.dimension_semantics<arbitrary>], iteration_bounds = array<i64: 1, 4>, scalar_prefetch = 0 : i64, scratch_operands = 0 : i64, tpu.core_type = #tpu.core_type<tc>, window_params = [{transform_indices = @transform_0, window_bounds = array<i64: 1, 8, 128>}, {transform_indices = @transform_1, window_bounds = array<i64: 1, 8, 128>}, {transform_indices = @transform_2, window_bounds = array<i64: 8, 128>}, {transform_indices = @transform_3, window_bounds = array<i64: 1, 8, 128>}, {transform_indices = @transform_4, window_bounds = array<i64: 1, 8, 128>}]} {
    %c0 = arith.constant 0 : index
    %c0_0 = arith.constant 0 : index
    %c0_1 = arith.constant 0 : index
    %0 = vector.load %arg2[%c0, %c0_0, %c0_1] : memref<1x8x128xf32, #tpu.memory_space<vmem>>, vector<1x8x128xf32>
    %1 = vector.shape_cast %0 : vector<1x8x128xf32> to vector<8x128xf32>
    %c0_2 = arith.constant 0 : index
    %c0_3 = arith.constant 0 : index
    %c0_4 = arith.constant 0 : index
    %2 = vector.load %arg3[%c0_2, %c0_3, %c0_4] : memref<1x8x128xf32, #tpu.memory_space<vmem>>, vector<1x8x128xf32>
    %3 = vector.shape_cast %2 : vector<1x8x128xf32> to vector<8x128xf32>
    %c0_5 = arith.constant 0 : index
    %c0_6 = arith.constant 0 : index
    %4 = vector.load %arg4[%c0_5, %c0_6] : memref<8x128xf32, #tpu.memory_space<vmem>>, vector<8x128xf32>
    %5 = arith.subf %1, %3 : vector<8x128xf32>
    %6 = math.absf %5 : vector<8x128xf32>
    %7 = arith.mulf %6, %4 : vector<8x128xf32>
    %8 = vector.shape_cast %7 : vector<8x128xf32> to vector<1x8x128xf32>
    %cst = arith.constant dense<0.000000e+00> : vector<8x128xf32>
    %9 = vector.multi_reduction <add>, %8, %cst [0] : vector<1x8x128xf32> to vector<8x128xf32>
    %c0_i32 = arith.constant 0 : i32
    %10 = arith.cmpi eq, %arg1, %c0_i32 : i32
    %11 = arith.extui %10 : i1 to i32
    %c0_i32_7 = arith.constant 0 : i32
    %12 = arith.cmpi ne, %11, %c0_i32_7 : i32
    scf.if %12 {
      %c0_10 = arith.constant 0 : index
      %c0_11 = arith.constant 0 : index
      %c0_12 = arith.constant 0 : index
      %16 = vector.load %arg5[%c0_10, %c0_11, %c0_12] : memref<1x8x128xf32, #tpu.memory_space<vmem>>, vector<1x8x128xf32>
      %17 = vector.shape_cast %16 : vector<1x8x128xf32> to vector<8x128xf32>
      %18 = vector.shape_cast %9 : vector<8x128xf32> to vector<1x8x128xf32>
      tpu.vector_store %arg5[%c0_10, %c0_11, %c0_12], %18 {strides = array<i32>} : memref<1x8x128xf32, #tpu.memory_space<vmem>>, vector<1x8x128xf32>,
      %19 = vector.shape_cast %4 : vector<8x128xf32> to vector<1x8x128xf32>
      %cst_13 = arith.constant dense<0.000000e+00> : vector<8x128xf32>
      %20 = vector.multi_reduction <add>, %19, %cst_13 [0] : vector<1x8x128xf32> to vector<8x128xf32>
      %c0_14 = arith.constant 0 : index
      %c0_15 = arith.constant 0 : index
      %c0_16 = arith.constant 0 : index
      %21 = vector.load %arg6[%c0_14, %c0_15, %c0_16] : memref<1x8x128xf32, #tpu.memory_space<vmem>>, vector<1x8x128xf32>
      %22 = vector.shape_cast %21 : vector<1x8x128xf32> to vector<8x128xf32>
      %23 = vector.shape_cast %20 : vector<8x128xf32> to vector<1x8x128xf32>
      tpu.vector_store %arg6[%c0_14, %c0_15, %c0_16], %23 {strides = array<i32>} : memref<1x8x128xf32, #tpu.memory_space<vmem>>, vector<1x8x128xf32>,
    } else {
    }
    %c0_i32_8 = arith.constant 0 : i32
    %13 = arith.cmpi ne, %arg1, %c0_i32_8 : i32
    %14 = arith.extui %13 : i1 to i32
    %c0_i32_9 = arith.constant 0 : i32
    %15 = arith.cmpi ne, %14, %c0_i32_9 : i32
    scf.if %15 {
      %c0_10 = arith.constant 0 : index
      %c0_11 = arith.constant 0 : index
      %c0_12 = arith.constant 0 : index
      %16 = vector.load %arg5[%c0_10, %c0_11, %c0_12] : memref<1x8x128xf32, #tpu.memory_space<vmem>>, vector<1x8x128xf32>
      %17 = vector.shape_cast %16 : vector<1x8x128xf32> to vector<8x128xf32>
      %18 = arith.addf %17, %9 : vector<8x128xf32>
      %c0_13 = arith.constant 0 : index
      %c0_14 = arith.constant 0 : index
      %c0_15 = arith.constant 0 : index
      %19 = vector.load %arg5[%c0_13, %c0_14, %c0_15] : memref<1x8x128xf32, #tpu.memory_space<vmem>>, vector<1x8x128xf32>
      %20 = vector.shape_cast %19 : vector<1x8x128xf32> to vector<8x128xf32>
      %21 = vector.shape_cast %18 : vector<8x128xf32> to vector<1x8x128xf32>
      tpu.vector_store %arg5[%c0_13, %c0_14, %c0_15], %21 {strides = array<i32>} : memref<1x8x128xf32, #tpu.memory_space<vmem>>, vector<1x8x128xf32>,
    } else {
    }
    return
  }
  func.func @transform_0(%arg0: i32, %arg1: i32) -> (i32, i32, i32) {
    %c0_i32 = arith.constant 0 : i32
    %c0_i32_0 = arith.constant 0 : i32
    return %arg1, %arg0, %c0_i32 : i32, i32, i32
  }
  func.func @transform_1(%arg0: i32, %arg1: i32) -> (i32, i32, i32) {
    %c0_i32 = arith.constant 0 : i32
    %c0_i32_0 = arith.constant 0 : i32
    return %arg1, %arg0, %c0_i32 : i32, i32, i32
  }
  func.func @transform_2(%arg0: i32, %arg1: i32) -> (i32, i32) {
    %c0_i32 = arith.constant 0 : i32
    %c0_i32_0 = arith.constant 0 : i32
    return %arg0, %c0_i32 : i32, i32
  }
  func.func @transform_3(%arg0: i32, %arg1: i32) -> (i32, i32, i32) {
    %c0_i32 = arith.constant 0 : i32
    %c0_i32_0 = arith.constant 0 : i32
    %c0_i32_1 = arith.constant 0 : i32
    return %arg0, %c0_i32, %c0_i32_0 : i32, i32, i32
  }
  func.func @transform_4(%arg0: i32, %arg1: i32) -> (i32, i32, i32) {
    %c0_i32 = arith.constant 0 : i32
    %c0_i32_0 = arith.constant 0 : i32
    %c0_i32_1 = arith.constant 0 : i32
    return %arg0, %c0_i32, %c0_i32_0 : i32, i32, i32
  }
}

</mosaic_0001>

<llo_original>
// kernel: mask_l1_loss.1
$region0: #{mask_l1_loss.1}
  #allocation0 [shape = 'u32[]', space=smem, size = 0x4, offset = 0x4, fixed_abs, tag = 'smem constant byte address 0x4 - core index']
  #allocation1 [shape = 'u32[144,128]{1,0:T(1,128)}', space=vmem, size = 0x12000, scoped, tag = 'internal scratch']
  %s0 = inlined_call_operand.vmem [shape: f32[4,8,128], index: 0, kind: input, shape index: {}]
  %s1 = inlined_call_operand.vmem [shape: f32[4,8,128], index: 1, kind: input, shape index: {}]
  %s2 = inlined_call_operand.vmem [shape: f32[8,128], index: 2, kind: input, shape index: {}]
  %s3 = inlined_call_operand.vmem [shape: f32[1,8,128], index: 3, kind: output, shape index: {0}]
  %s4 = inlined_call_operand.vmem [shape: f32[1,8,128], index: 4, kind: output, shape index: {1}]
  %5 = xla_tuple %s3, %s4
  %s6 = sld [smem:[#allocation0]]
  $region61: #{mask_l1_loss.1} parent=0
    _
  %s8 = ssub.s32 1, %s6
  %s9 = scalar_select 0, %s8, %s6
  loop: start=0, step=1, limit=6
  $region2: #{mask_l1_loss.1} parent=0 // loop_pre_header
    _
  $region3: #{mask_l1_loss.1} parent=0 // loop_header
    %s11 = sphi 0, %s15
    %p12 = scmp.ge.s32.totalorder %s11, 6
    %s18 = sphi 0, %s30
    %s19 = sphi 0, %s26
    %s20 = sphi 0, %s18
    %s21 = sphi 0, %s19
    %s22 = sphi 0, %s20
    %s23 = sphi 0, %s21
    %s35 = sphi 0, %s37
    %s38 = sphi 0, %s35
    %s39 = sphi 0, %s38
    %s55 = sphi 0, %s39
    %s63 = sphi 0, %s65
    %s66 = sphi 0, %s63
    %s67 = sphi 0, %s66
    %s83 = sphi 0, %s67
    %s89 = sphi 0, %s91
    %s92 = sphi 0, %s89
    %s93 = sphi 0, %s92
    %s109 = sphi 0, %s93
    %s115 = sphi 0, %s117
    %s118 = sphi 0, %s115
    %s119 = sphi 0, %s118
    %s135 = sphi 0, %s119
    %s141 = sphi 0, %s143
    %s144 = sphi 0, %s141
    %s145 = sphi 0, %s144
    %s161 = sphi 0, %s145
  $region4: #{mask_l1_loss.1} parent=0 // loop_header_branch
    %14 = sbr.rel (%p12) target = $region8
  $region5: #{mask_l1_loss.1} parent=0 // loop_body
    %s16 = ssub.s32 %s11, 1
    %s17 = ssub.s32 %s11, 2
    %s24 = sadd.s32 1, %s19
    %p25 = scmp.ge.s32.totalorder %s24, 4
    %s26 = scalar_select %p25, 0, %s24
    %s27 = sadd.s32 1, %s18
    %s28 = scalar_select %p25, %s27, %s18
    %p29 = scmp.ge.s32.totalorder %s28, 1
    %s30 = scalar_select %p29, 0, %s28
    %s31 = ssub.s32 %s19, %s26
    %s32 = ssub.s32 %s18, %s30
    %s33 = sor.u32 %s31, %s32
    %p34 = scmp.eq.s32.totalorder %s33, 0
    %s36 = sadd.s32 %s35, 1
    %s37 = scalar_select %p34, %s35, %s36
    %p40 = pneg %p34
    %p41 = scmp.eq.s32.totalorder %s11, 3
    %p42 = por %p40, %p41
    %p43 = scmp.ne.s32.totalorder %s35, %s38
    %p44 = scmp.eq.s32.totalorder %s11, 0
    %p45 = por %p43, %p44
    %p46 = scmp.ne.s32.totalorder %s35, %s38
    %p47 = scmp.eq.s32.totalorder %s16, 3
    %p48 = por %p46, %p47
    %p49 = scmp.ne.s32.totalorder %s38, %s39
    %p50 = scmp.eq.s32.totalorder %s16, 0
    %p51 = por %p49, %p50
    %p52 = scmp.ne.s32.totalorder %s38, %s39
    %p53 = scmp.eq.s32.totalorder %s17, 3
    %p54 = por %p52, %p53
    %p56 = scmp.ne.s32.totalorder %s39, %s55
    %p57 = scmp.eq.s32.totalorder %s17, 0
    %p58 = por %p56, %p57
    %s59 = ssub.s32 %s19, %s26
    %s60 = ssub.s32 %s18, %s30
    %s61 = sor.u32 %s59, %s60
    %p62 = scmp.eq.s32.totalorder %s61, 0
    %s64 = sadd.s32 %s63, 1
    %s65 = scalar_select %p62, %s63, %s64
    %p68 = pneg %p62
    %p69 = scmp.eq.s32.totalorder %s11, 3
    %p70 = por %p68, %p69
    %p71 = scmp.ne.s32.totalorder %s63, %s66
    %p72 = scmp.eq.s32.totalorder %s11, 0
    %p73 = por %p71, %p72
    %p74 = scmp.ne.s32.totalorder %s63, %s66
    %p75 = scmp.eq.s32.totalorder %s16, 3
    %p76 = por %p74, %p75
    %p77 = scmp.ne.s32.totalorder %s66, %s67
    %p78 = scmp.eq.s32.totalorder %s16, 0
    %p79 = por %p77, %p78
    %p80 = scmp.ne.s32.totalorder %s66, %s67
    %p81 = scmp.eq.s32.totalorder %s17, 3
    %p82 = por %p80, %p81
    %p84 = scmp.ne.s32.totalorder %s67, %s83
    %p85 = scmp.eq.s32.totalorder %s17, 0
    %p86 = por %p84, %p85
    %s87 = ssub.s32 %s18, %s30
    %p88 = scmp.eq.s32.totalorder %s87, 0
    %s90 = sadd.s32 %s89, 1
    %s91 = scalar_select %p88, %s89, %s90
    %p94 = pneg %p88
    %p95 = scmp.eq.s32.totalorder %s11, 3
    %p96 = por %p94, %p95
    %p97 = scmp.ne.s32.totalorder %s89, %s92
    %p98 = scmp.eq.s32.totalorder %s11, 0
    %p99 = por %p97, %p98
    %p100 = scmp.ne.s32.totalorder %s89, %s92
    %p101 = scmp.eq.s32.totalorder %s16, 3
    %p102 = por %p100, %p101
    %p103 = scmp.ne.s32.totalorder %s92, %s93
    %p104 = scmp.eq.s32.totalorder %s16, 0
    %p105 = por %p103, %p104
    %p106 = scmp.ne.s32.totalorder %s92, %s93
    %p107 = scmp.eq.s32.totalorder %s17, 3
    %p108 = por %p106, %p107
    %p110 = scmp.ne.s32.totalorder %s93, %s109
    %p111 = scmp.eq.s32.totalorder %s17, 0
    %p112 = por %p110, %p111
    %s113 = ssub.s32 %s18, %s30
    %p114 = scmp.eq.s32.totalorder %s113, 0
    %s116 = sadd.s32 %s115, 1
    %s117 = scalar_select %p114, %s115, %s116
    %p120 = pneg %p114
    %p121 = scmp.eq.s32.totalorder %s11, 3
    %p122 = por %p120, %p121
    %p123 = scmp.ne.s32.totalorder %s115, %s118
    %p124 = scmp.eq.s32.totalorder %s11, 0
    %p125 = por %p123, %p124
    %p126 = scmp.ne.s32.totalorder %s115, %s118
    %p127 = scmp.eq.s32.totalorder %s16, 3
    %p128 = por %p126, %p127
    %p129 = scmp.ne.s32.totalorder %s118, %s119
    %p130 = scmp.eq.s32.totalorder %s16, 0
    %p131 = por %p129, %p130
    %p132 = scmp.ne.s32.totalorder %s118, %s119
    %p133 = scmp.eq.s32.totalorder %s17, 3
    %p134 = por %p132, %p133
    %p136 = scmp.ne.s32.totalorder %s119, %s135
    %p137 = scmp.eq.s32.totalorder %s17, 0
    %p138 = por %p136, %p137
    %s139 = ssub.s32 %s18, %s30
    %p140 = scmp.eq.s32.totalorder %s139, 0
    %s142 = sadd.s32 %s141, 1
    %s143 = scalar_select %p140, %s141, %s142
    %p146 = pneg %p140
    %p147 = scmp.eq.s32.totalorder %s11, 3
    %p148 = por %p146, %p147
    %p149 = scmp.ne.s32.totalorder %s141, %s144
    %p150 = scmp.eq.s32.totalorder %s11, 0
    %p151 = por %p149, %p150
    %p152 = scmp.ne.s32.totalorder %s141, %s144
    %p153 = scmp.eq.s32.totalorder %s16, 3
    %p154 = por %p152, %p153
    %p155 = scmp.ne.s32.totalorder %s144, %s145
    %p156 = scmp.eq.s32.totalorder %s16, 0
    %p157 = por %p155, %p156
    %p158 = scmp.ne.s32.totalorder %s144, %s145
    %p159 = scmp.eq.s32.totalorder %s17, 3
    %p160 = por %p158, %p159
    %p162 = scmp.ne.s32.totalorder %s145, %s161
    %p163 = scmp.eq.s32.totalorder %s17, 0
    %p164 = por %p162, %p163
    %p165 = scmp.le.s32.totalorder 1, %s11
    %p166 = scmp.lt.s32.totalorder %s11, 5
    %p167 = pnand %p165, %p166
    %p168 = pneg %p167
    // Predicated region
    $region9: #{mask_l1_loss.1} parent=5 // pred_check
      _
    $region10: #{mask_l1_loss.1} parent=5 // pred_check_branch
      %170 = sbr.rel (%p167) target = $region12
    $region11: #{mask_l1_loss.1} parent=5 // pred_region
      %s171 = ssub.s32 %s11, 1
      // Predicated region
      $region13: #{mask_l1_loss.1} parent=11 // pred_check
        %p172 = pneg %p105
      $region14: #{mask_l1_loss.1} parent=11 // pred_check_branch
        %174 = sbr.rel (%p172) target = $region16
      $region15: #{mask_l1_loss.1} parent=11 // pred_region
        %p175 = scmp.lt.s32.totalorder %s20, 0
        %s176 = scalar_select %p175, %s20, 0
        %s177 = smul.addr %s176, 8
        %s178 = scalar_lea.vmem %s2, %s177
      $region16: #{mask_l1_loss.1} parent=11 // pred_fallthru
        _
    $region12: #{mask_l1_loss.1} parent=5 // pred_fallthru
      _
    %p179 = scmp.lt.s32.totalorder %s11, 4
    // Predicated region
    $region17: #{mask_l1_loss.1} parent=5 // pred_check
      %p180 = pneg %p179
    $region18: #{mask_l1_loss.1} parent=5 // pred_check_branch
      %182 = sbr.rel (%p180) target = $region20
    $region19: #{mask_l1_loss.1} parent=5 // pred_region
      // Predicated region
      $region21: #{mask_l1_loss.1} parent=19 // pred_check
        %p183 = pneg %p45
      $region22: #{mask_l1_loss.1} parent=19 // pred_check_branch
        %185 = sbr.rel (%p183) target = $region24
      $region23: #{mask_l1_loss.1} parent=19 // pred_region
        %p186 = scmp.lt.s32.totalorder %s19, 3
        %s187 = scalar_select %p186, %s19, 3
        %p188 = scmp.lt.s32.totalorder %s18, 0
        %s189 = scalar_select %p188, %s18, 0
        %s190 = sadd.s32 %s189, %s187
        %s191 = smul.addr %s190, 8
        %s192 = scalar_lea.vmem %s0, %s191
      $region24: #{mask_l1_loss.1} parent=19 // pred_fallthru
        _
      // Predicated region
      $region25: #{mask_l1_loss.1} parent=19 // pred_check
        %p193 = pneg %p73
      $region26: #{mask_l1_loss.1} parent=19 // pred_check_branch
        %195 = sbr.rel (%p193) target = $region28
      $region27: #{mask_l1_loss.1} parent=19 // pred_region
        %p196 = scmp.lt.s32.totalorder %s19, 3
        %s197 = scalar_select %p196, %s19, 3
        %p198 = scmp.lt.s32.totalorder %s18, 0
        %s199 = scalar_select %p198, %s18, 0
        %s200 = sadd.s32 %s199, %s197
        %s201 = smul.addr %s200, 8
        %s202 = scalar_lea.vmem %s1, %s201
      $region28: #{mask_l1_loss.1} parent=19 // pred_fallthru
        _
    $region20: #{mask_l1_loss.1} parent=5 // pred_fallthru
      _
    %p203 = scmp.le.s32.totalorder 1, %s11
    %p204 = scmp.lt.s32.totalorder %s11, 5
    %p205 = pnand %p203, %p204
    %p206 = pneg %p205
    // Predicated region
    $region29: #{mask_l1_loss.1} parent=5 // pred_check
      _
    $region30: #{mask_l1_loss.1} parent=5 // pred_check_branch
      %208 = sbr.rel (%p205) target = $region32
    $region31: #{mask_l1_loss.1} parent=5 // pred_region
      %s209 = ssub.s32 %s11, 1
      %p210 = scmp.lt.s32.totalorder %s21, 3
      %s211 = scalar_select %p210, %s21, 3
      %p212 = scmp.lt.s32.totalorder %s20, 0
      %s213 = scalar_select %p212, %s20, 0
      %s214 = sadd.s32 %s213, %s211
      %s215 = smul.addr %s214, 8
      %s216 = scalar_lea.vmem %s0, %s215
      %p217 = pneg %p51
      %p218 = pneg %p48
      %p219 = scmp.lt.s32.totalorder %s21, 3
      %s220 = scalar_select %p219, %s21, 3
      %p221 = scmp.lt.s32.totalorder %s20, 0
      %s222 = scalar_select %p221, %s20, 0
      %s223 = sadd.s32 %s222, %s220
      %s224 = smul.addr %s223, 8
      %s225 = scalar_lea.vmem %s1, %s224
      %p226 = pneg %p79
      %p227 = pneg %p76
      %p228 = scmp.lt.s32.totalorder %s20, 0
      %s229 = scalar_select %p228, %s20, 0
      %s230 = smul.addr %s229, 8
      %s231 = scalar_lea.vmem %s2, %s230
      %p232 = pneg %p105
      %p233 = pneg %p102
      %p234 = pneg %p131
      %p235 = pneg %p128
      %p236 = scmp.lt.s32.totalorder %s20, 0
      %s237 = scalar_select %p236, %s20, 0
      %s238 = smul.addr %s237, 8
      %s239 = scalar_lea.vmem %s3, %s238
      %p240 = pneg %p157
      %p241 = pneg %p154
      %p242 = scmp.lt.s32.totalorder %s20, 0
      %s243 = scalar_select %p242, %s20, 0
      %s244 = smul.addr %s243, 8
      %s245 = scalar_lea.vmem %s4, %s244
      %p246 = scmp.lt.s32.totalorder %s21, 3
      %s247 = scalar_select %p246, %s21, 3
      %p248 = scmp.lt.s32.totalorder %s20, 0
      %s249 = scalar_select %p248, %s20, 0
      %s250 = sadd.s32 %s249, %s247
      %s251 = smul.addr %s250, 8
      %s252 = scalar_lea.vmem %s0, %s251
      %p253 = scmp.lt.s32.totalorder %s21, 3
      %s254 = scalar_select %p253, %s21, 3
      %p255 = scmp.lt.s32.totalorder %s20, 0
      %s256 = scalar_select %p255, %s20, 0
      %s257 = sadd.s32 %s256, %s254
      %s258 = smul.addr %s257, 8
      %s259 = scalar_lea.vmem %s1, %s258
      %p260 = scmp.lt.s32.totalorder %s20, 0
      %s261 = scalar_select %p260, %s20, 0
      %s262 = smul.addr %s261, 8
      %s263 = scalar_lea.vmem %s2, %s262
      %p264 = scmp.lt.s32.totalorder %s20, 0
      %s265 = scalar_select %p264, %s20, 0
      %s266 = smul.addr %s265, 8
      %s267 = scalar_lea.vmem %s3, %s266
      %p268 = scmp.lt.s32.totalorder %s20, 0
      %s269 = scalar_select %p268, %s20, 0
      %s270 = smul.addr %s269, 8
      %s271 = scalar_lea.vmem %s4, %s270
      %v272 = vld [vmem:[%s252] sm:$0xff]
      %v273 = vld [vmem:[%s259] sm:$0xff]
      %v274 = vld [vmem:[%s263] sm:$0xff]
      %v275 = vsub.f32 %v272, %v273
      %v276 = vand.u32 2147483647, %v275
      %v277 = vmul.f32 %v276, %v274
      %v278 = vadd.f32 %v277, 0.0
      %p279 = scmp.eq.s32.totalorder %s21, 0
      // Predicated region
      $region33: #{mask_l1_loss.1} parent=31 // pred_check
        %p280 = pneg %p279
      $region34: #{mask_l1_loss.1} parent=31 // pred_check_branch
        %282 = sbr.rel (%p280) target = $region36
      $region35: #{mask_l1_loss.1} parent=31 // pred_region
        %283 = vst [vmem:[%s267] sm:$0xff] %v278
        %v284 = vadd.f32 %v274, 0.0
        %285 = vst [vmem:[%s271] sm:$0xff] %v284
      $region36: #{mask_l1_loss.1} parent=31 // pred_fallthru
        _
      %p286 = scmp.ne.s32.totalorder %s21, 0
      // Predicated region
      $region37: #{mask_l1_loss.1} parent=31 // pred_check
        %p287 = pneg %p286
      $region38: #{mask_l1_loss.1} parent=31 // pred_check_branch
        %289 = sbr.rel (%p287) target = $region40
      $region39: #{mask_l1_loss.1} parent=31 // pred_region
        %v290 = vld [vmem:[%s267] sm:$0xff]
        %v291 = vadd.f32 %v290, %v278
        %292 = vst [vmem:[%s267] sm:$0xff] %v291
      $region40: #{mask_l1_loss.1} parent=31 // pred_fallthru
        _
      %p293 = scmp.lt.s32.totalorder %s20, 0
      %s294 = scalar_select %p293, %s20, 0
      %s295 = smul.addr %s294, 8
      %s296 = scalar_lea.vmem %s3, %s295
      %p297 = scmp.lt.s32.totalorder %s20, 0
      %s298 = scalar_select %p297, %s20, 0
      %s299 = smul.addr %s298, 8
      %s300 = scalar_lea.vmem %s4, %s299
      // Predicated region
      $region41: #{mask_l1_loss.1} parent=31 // pred_check
        %p301 = pneg %p128
      $region42: #{mask_l1_loss.1} parent=31 // pred_check_branch
        %303 = sbr.rel (%p301) target = $region44
      $region43: #{mask_l1_loss.1} parent=31 // pred_region
        _
      $region44: #{mask_l1_loss.1} parent=31 // pred_fallthru
        _
      // Predicated region
      $region45: #{mask_l1_loss.1} parent=31 // pred_check
        %p304 = pneg %p154
      $region46: #{mask_l1_loss.1} parent=31 // pred_check_branch
        %306 = sbr.rel (%p304) target = $region48
      $region47: #{mask_l1_loss.1} parent=31 // pred_region
        _
      $region48: #{mask_l1_loss.1} parent=31 // pred_fallthru
        _
      // Predicated region
      $region49: #{mask_l1_loss.1} parent=31 // pred_check
        %p307 = pneg %p128
      $region50: #{mask_l1_loss.1} parent=31 // pred_check_branch
        %309 = sbr.rel (%p307) target = $region52
      $region51: #{mask_l1_loss.1} parent=31 // pred_region
        %p310 = scmp.lt.s32.totalorder %s20, 0
        %s311 = scalar_select %p310, %s20, 0
        %s312 = smul.addr %s311, 8
        %s313 = scalar_lea.vmem %s3, %s312
      $region52: #{mask_l1_loss.1} parent=31 // pred_fallthru
        _
      // Predicated region
      $region53: #{mask_l1_loss.1} parent=31 // pred_check
        %p314 = pneg %p154
      $region54: #{mask_l1_loss.1} parent=31 // pred_check_branch
        %316 = sbr.rel (%p314) target = $region56
      $region55: #{mask_l1_loss.1} parent=31 // pred_region
        %p317 = scmp.lt.s32.totalorder %s20, 0
        %s318 = scalar_select %p317, %s20, 0
        %s319 = smul.addr %s318, 8
        %s320 = scalar_lea.vmem %s4, %s319
      $region56: #{mask_l1_loss.1} parent=31 // pred_fallthru
        _
    $region32: #{mask_l1_loss.1} parent=5 // pred_fallthru
      _
    %p321 = scmp.le.s32.totalorder 2, %s11
    // Predicated region
    $region57: #{mask_l1_loss.1} parent=5 // pred_check
      %p322 = pneg %p321
    $region58: #{mask_l1_loss.1} parent=5 // pred_check_branch
      %324 = sbr.rel (%p322) target = $region60
    $region59: #{mask_l1_loss.1} parent=5 // pred_region
      %s325 = ssub.s32 %s11, 2
    $region60: #{mask_l1_loss.1} parent=5 // pred_fallthru
      _
  $region6: #{mask_l1_loss.1} parent=0 // loop_footer
    %s15 = sadd.s32 1, %s11
  $region7: #{mask_l1_loss.1} parent=0 // loop_footer_branch
    %10 = sbr.rel target = $region3
  $region8: #{mask_l1_loss.1} parent=0 // loop_exit
    _

</llo_original>
